<compile_context>
chip_gen: v7x
topology: tpu7x:2x2x1
jax: 0.10.0
libtpu: 0.0.40
codegen_flags: <defaults>
</compile_context>

<pallas_src>
import math

import jax
import jax.numpy as jnp
from jax.experimental import pallas as pl
from jax.experimental.pallas import tpu as pltpu  # noqa: F401  (kept for TPU-specific extensions)


# ----------------------------------------------------------------------------
# Kernel: single-step broadcast add over the whole lane-dense slab.
#   x_ref : (B, L*D)   pe_ref : (1, L*D)   o_ref : (B, L*D)
# ----------------------------------------------------------------------------
def _add_pe_kernel(x_ref, pe_ref, o_ref):
    o_ref[...] = x_ref[...] + pe_ref[...]


def make_positional_encoding(length: int, d_model: int, dtype=jnp.float32):
    """Deterministically build the sin/cos table, same math as the PyTorch __init__."""
    position = jnp.arange(length, dtype=jnp.float32)[:, None]             # (L, 1)
    div_term = jnp.exp(
        jnp.arange(0, d_model, 2, dtype=jnp.float32) * (-math.log(10000.0) / d_model)
    )                                                                     # (D/2,)
    angles = position * div_term                                          # (L, D/2)
    pe = jnp.zeros((length, d_model), dtype=jnp.float32)
    pe = pe.at[:, 0::2].set(jnp.sin(angles))
    pe = pe.at[:, 1::2].set(jnp.cos(angles))
    return pe[None, :, :].astype(dtype)                                   # (1, L, D)


def positional_encoding_forward(x: jax.Array, pe: jax.Array) -> jax.Array:
    """x: (B, L, D), pe: (1, L, D) -> (B, L, D)."""
    B, L, D = x.shape
    assert pe.shape == (1, L, D)

    # Lane-dense flatten (free reshape of contiguous data): last dim becomes L*D.
    x2 = x.reshape(B, L * D)
    pe2 = pe.reshape(1, L * D)

    # Single grid step, full-array blocks resident in VMEM.
    out2 = pl.pallas_call(
        _add_pe_kernel,
        out_shape=jax.ShapeDtypeStruct((B, L * D), x.dtype),
    )(x2, pe2)

    return out2.reshape(B, L, D)


if __name__ == "__main__":
    # Module was constructed as PositionalEncoding(len=100, d_model=20)
    LEN, D_MODEL, BATCH = 100, 20, 2

    key = jax.random.PRNGKey(0)
    x = jax.random.normal(key, (BATCH, LEN, D_MODEL), dtype=jnp.float32)

    pe = make_positional_encoding(LEN, D_MODEL, dtype=jnp.float32)

    out = positional_encoding_forward(x, pe)
    out = jax.block_until_ready(out)

    # Correctness check against the plain-JAX reference of the PyTorch forward.
    ref = x + pe
    assert out.shape == (BATCH, LEN, D_MODEL)
    assert out.dtype == x.dtype
    assert jnp.allclose(out, ref, atol=1e-6, rtol=1e-6)

    print("KERNEL_OK")
</pallas_src>

<mosaic_0001>
module attributes {stable_mosaic.version = 11 : i64} {
  func.func @_add_pe_kernel(%arg0: memref<2x2000xf32, #tpu.memory_space<vmem>>, %arg1: memref<1x2000xf32, #tpu.memory_space<vmem>>, %arg2: memref<2x2000xf32, #tpu.memory_space<vmem>>) attributes {dimension_semantics = [], scalar_prefetch = 0 : i64, scratch_operands = 0 : i64, tpu.core_type = #tpu.core_type<tc>} {
    %c0 = arith.constant 0 : index
    %c0_0 = arith.constant 0 : index
    %0 = vector.load %arg0[%c0, %c0_0] : memref<2x2000xf32, #tpu.memory_space<vmem>>, vector<2x2000xf32>
    %c0_1 = arith.constant 0 : index
    %c0_2 = arith.constant 0 : index
    %1 = vector.load %arg1[%c0_1, %c0_2] : memref<1x2000xf32, #tpu.memory_space<vmem>>, vector<1x2000xf32>
    %2 = vector.broadcast %1 : vector<1x2000xf32> to vector<2x2000xf32>
    %3 = arith.addf %0, %2 : vector<2x2000xf32>
    %c0_3 = arith.constant 0 : index
    %c0_4 = arith.constant 0 : index
    %4 = vector.load %arg2[%c0_3, %c0_4] : memref<2x2000xf32, #tpu.memory_space<vmem>>, vector<2x2000xf32>
    tpu.vector_store %arg2[%c0_3, %c0_4], %3 {strides = array<i32>} : memref<2x2000xf32, #tpu.memory_space<vmem>>, vector<2x2000xf32>,
    return
  }
}

</mosaic_0001>

<llo_original>
// kernel: tpu_custom_call.1
$region0: #{tpu_custom_call.1}
  #allocation0 [shape = 'u32[]', space=smem, size = 0x4, offset = 0x4, fixed_abs, tag = 'smem constant byte address 0x4 - core index']
  #allocation1 [shape = 'u32[144,128]{1,0:T(1,128)}', space=vmem, size = 0x12000, scoped, tag = 'internal scratch']
  %s0 = inlined_call_operand.hbm [shape: f32[2,2000], index: 0, kind: input, shape index: {}]
  %s1 = inlined_call_operand.hbm [shape: f32[1,2000], index: 1, kind: input, shape index: {}]
  %s2 = inlined_call_operand.hbm [shape: f32[2,2000], index: 2, kind: output, shape index: {}]
  %s3 = sld [smem:[#allocation0]]
  $region26: #{tpu_custom_call.1} parent=0
    _
  %s5 = ssub.s32 1, %s3
  %s6 = scalar_select 0, %s5, %s3
  $region1: #{tpu_custom_call.1} parent=0
    #allocation2 [shape = 'u8[16384]{0}', space=vmem, size = 0x4000, scoped, tag = 'input window, operand 0, single buffered']
    #allocation3 [shape = 's32[1]{0}', space=sflag, size = 0x4, scoped, tag = 'scoped memory for tpu_custom_call.1']
    #allocation4 [shape = 's32[1]{0}', space=sflag, size = 0x4, scoped, tag = 'scoped memory for tpu_custom_call.1']
    #allocation5 [shape = 'u8[8192]{0}', space=vmem, size = 0x2000, scoped, tag = 'input window, operand 1, single buffered']
    #allocation6 [shape = 's32[1]{0}', space=sflag, size = 0x4, scoped, tag = 'scoped memory for tpu_custom_call.1']
    #allocation7 [shape = 'u8[16384]{0}', space=vmem, size = 0x4000, scoped, tag = 'output window, operand 0, single buffered']
    %7 = vsyncpa [#allocation3], 0
    %8 = vsyncpa [#allocation6], 0
    %9 = vsyncpa [#allocation4], 0
    // Predicated region
    $region2: #{tpu_custom_call.1} parent=1 // pred_check
      _
    $region3: #{tpu_custom_call.1} parent=1 // pred_check_branch
      %11 = sbr.rel (0) target = $region5
    $region4: #{tpu_custom_call.1} parent=1 // pred_region
      %s13 = ssub.s32 512, 512
      %14 = vsyncadd [#allocation3], %s13
      %s16 = sshll.u32 [#allocation2], 4
      %s17 = int_to_ptr.vmem [resolvable:$true] %s16
      %19 = dma.hbm_to_vmem [thread:$0]  %s0, 512, %s17, [#allocation3]
    $region5: #{tpu_custom_call.1} parent=1 // pred_fallthru
      _
    // Predicated region
    $region6: #{tpu_custom_call.1} parent=1 // pred_check
      _
    $region7: #{tpu_custom_call.1} parent=1 // pred_check_branch
      %21 = sbr.rel (0) target = $region9
    $region8: #{tpu_custom_call.1} parent=1 // pred_region
      %s23 = ssub.s32 256, 256
      %24 = vsyncadd [#allocation6], %s23
      %s26 = sshll.u32 [#allocation5], 4
      %s27 = int_to_ptr.vmem [resolvable:$true] %s26
      %29 = dma.hbm_to_vmem [thread:$0]  %s1, 256, %s27, [#allocation6]
    $region9: #{tpu_custom_call.1} parent=1 // pred_fallthru
      _
    // Predicated region
    $region10: #{tpu_custom_call.1} parent=1 // pred_check
      _
    $region11: #{tpu_custom_call.1} parent=1 // pred_check_branch
      %31 = sbr.rel (0) target = $region13
    $region12: #{tpu_custom_call.1} parent=1 // pred_region
      %32 = dma.done [#allocation3], 512
    $region13: #{tpu_custom_call.1} parent=1 // pred_fallthru
      _
    // Predicated region
    $region14: #{tpu_custom_call.1} parent=1 // pred_check
      _
    $region15: #{tpu_custom_call.1} parent=1 // pred_check_branch
      %34 = sbr.rel (0) target = $region17
    $region16: #{tpu_custom_call.1} parent=1 // pred_region
      %35 = dma.done [#allocation6], 256
    $region17: #{tpu_custom_call.1} parent=1 // pred_fallthru
      _
    %v36 = vld [vmem:[#allocation2] sm:$0xff]
    %v37 = vld [vmem:[#allocation2 + $0x8] sm:$0xff]
    %v38 = vld [vmem:[#allocation2 + $0x10] sm:$0xff]
    %v39 = vld [vmem:[#allocation2 + $0x18] sm:$0xff]
    %v40 = vld [vmem:[#allocation5] sm:$0xff]
    %v41 = vld [vmem:[#allocation5 + $0x8] sm:$0xff]
    %v44 = vlaneseq
    %v45 = vshrl.u32 %v44, 7
    %v46 = vsub.s32 0, %v45
    %v47 = vrot.slane %v40, %v46
    %v48 = vlaneseq
    %v49 = vshrl.u32 %v48, 7
    %v50 = vsub.s32 1, %v49
    %v51 = vrot.slane %v40, %v50
    %v52 = vlaneseq
    %v53 = vshrl.u32 %v52, 7
    %v54 = vsub.s32 2, %v53
    %v55 = vrot.slane %v40, %v54
    %v56 = vlaneseq
    %v57 = vshrl.u32 %v56, 7
    %v58 = vsub.s32 3, %v57
    %v59 = vrot.slane %v40, %v58
    %v60 = vlaneseq
    %v61 = vshrl.u32 %v60, 7
    %v62 = vsub.s32 4, %v61
    %v63 = vrot.slane %v40, %v62
    %v64 = vlaneseq
    %v65 = vshrl.u32 %v64, 7
    %v66 = vsub.s32 5, %v65
    %v67 = vrot.slane %v40, %v66
    %v68 = vlaneseq
    %v69 = vshrl.u32 %v68, 7
    %v70 = vsub.s32 6, %v69
    %v71 = vrot.slane %v40, %v70
    %v72 = vlaneseq
    %v73 = vshrl.u32 %v72, 7
    %v74 = vsub.s32 7, %v73
    %v75 = vrot.slane %v40, %v74
    %v76 = vlaneseq
    %v77 = vshrl.u32 %v76, 7
    %v78 = vsub.s32 0, %v77
    %v79 = vrot.slane %v41, %v78
    %v80 = vlaneseq
    %v81 = vshrl.u32 %v80, 7
    %v82 = vsub.s32 1, %v81
    %v83 = vrot.slane %v41, %v82
    %v84 = vlaneseq
    %v85 = vshrl.u32 %v84, 7
    %v86 = vsub.s32 2, %v85
    %v87 = vrot.slane %v41, %v86
    %v88 = vlaneseq
    %v89 = vshrl.u32 %v88, 7
    %v90 = vsub.s32 3, %v89
    %v91 = vrot.slane %v41, %v90
    %v92 = vlaneseq
    %v93 = vshrl.u32 %v92, 7
    %v94 = vsub.s32 4, %v93
    %v95 = vrot.slane %v41, %v94
    %v96 = vlaneseq
    %v97 = vshrl.u32 %v96, 7
    %v98 = vsub.s32 5, %v97
    %v99 = vrot.slane %v41, %v98
    %v100 = vlaneseq
    %v101 = vshrl.u32 %v100, 7
    %v102 = vsub.s32 6, %v101
    %v103 = vrot.slane %v41, %v102
    %v104 = vlaneseq
    %v105 = vshrl.u32 %v104, 7
    %v106 = vsub.s32 7, %v105
    %v107 = vrot.slane %v41, %v106
    %v108 = vcombine.low %v47, %v51
    %v109 = vcombine.low %v55, %v59
    %v111 = vunpack.c.l.s4 1983009808
    %v112 = vunpack.c.0.s8 %v111
    %v113 = vlaneseq
    %v114 = vshrl.u32 %v113, 7
    %v115 = vsub.s32 %v112, %v114
    %v116 = vrot.slane %v108, %v115
    %v118 = vunpack.c.l.s4 1983009808
    %v119 = vunpack.c.0.s8 %v118
    %v120 = vlaneseq
    %v121 = vshrl.u32 %v120, 7
    %v122 = vsub.s32 %v119, %v121
    %v123 = vrot.slane %v109, %v122
    %v124 = vcombine.low %v116, %v123
    %v125 = vcombine.low %v63, %v67
    %v126 = vcombine.low %v71, %v75
    %v128 = vunpack.c.l.s4 1983009808
    %v129 = vunpack.c.0.s8 %v128
    %v130 = vlaneseq
    %v131 = vshrl.u32 %v130, 7
    %v132 = vsub.s32 %v129, %v131
    %v133 = vrot.slane %v125, %v132
    %v135 = vunpack.c.l.s4 1983009808
    %v136 = vunpack.c.0.s8 %v135
    %v137 = vlaneseq
    %v138 = vshrl.u32 %v137, 7
    %v139 = vsub.s32 %v136, %v138
    %v140 = vrot.slane %v126, %v139
    %v141 = vcombine.low %v133, %v140
    %v142 = vcombine.low %v79, %v83
    %v143 = vcombine.low %v87, %v91
    %v145 = vunpack.c.l.s4 1983009808
    %v146 = vunpack.c.0.s8 %v145
    %v147 = vlaneseq
    %v148 = vshrl.u32 %v147, 7
    %v149 = vsub.s32 %v146, %v148
    %v150 = vrot.slane %v142, %v149
    %v152 = vunpack.c.l.s4 1983009808
    %v153 = vunpack.c.0.s8 %v152
    %v154 = vlaneseq
    %v155 = vshrl.u32 %v154, 7
    %v156 = vsub.s32 %v153, %v155
    %v157 = vrot.slane %v143, %v156
    %v158 = vcombine.low %v150, %v157
    %v159 = vcombine.low %v95, %v99
    %v160 = vcombine.low %v103, %v107
    %v162 = vunpack.c.l.s4 1983009808
    %v163 = vunpack.c.0.s8 %v162
    %v164 = vlaneseq
    %v165 = vshrl.u32 %v164, 7
    %v166 = vsub.s32 %v163, %v165
    %v167 = vrot.slane %v159, %v166
    %v169 = vunpack.c.l.s4 1983009808
    %v170 = vunpack.c.0.s8 %v169
    %v171 = vlaneseq
    %v172 = vshrl.u32 %v171, 7
    %v173 = vsub.s32 %v170, %v172
    %v174 = vrot.slane %v160, %v173
    %v175 = vcombine.low %v167, %v174
    %v180 = vadd.f32 %v36, %v124
    %v181 = vadd.f32 %v37, %v141
    %v182 = vadd.f32 %v38, %v158
    %v183 = vadd.f32 %v39, %v175
    %184 = vst [vmem:[#allocation7] sm:$0xff] %v180
    %185 = vst [vmem:[#allocation7 + $0x8] sm:$0xff] %v181
    %186 = vst [vmem:[#allocation7 + $0x10] sm:$0xff] %v182
    %vm187 = vcmask 1041408
    %vm188 = vcmask 1043458
    %vm189 = vmor %vm188, %vm187
    %vm190 = vcmask 1045508
    %vm191 = vmor %vm190, %vm189
    %vm192 = vcmask 654342
    %vm193 = vmor %vm192, %vm191
    %194 = vst.msk [vmem:[#allocation7 + $0x18] sm:$0xff] %vm193, %v183
    // Predicated region
    $region18: #{tpu_custom_call.1} parent=1 // pred_check
      _
    $region19: #{tpu_custom_call.1} parent=1 // pred_check_branch
      %196 = sbr.rel (0) target = $region21
    $region20: #{tpu_custom_call.1} parent=1 // pred_region
      %s198 = ssub.s32 512, 512
      %199 = vsyncadd [#allocation4], %s198
      %s201 = sshll.u32 [#allocation7], 4
      %s202 = int_to_ptr.vmem [resolvable:$true] %s201
      %204 = dma.vmem_to_hbm [thread:$0]  %s202, 512, %s2, [#allocation4]
    $region21: #{tpu_custom_call.1} parent=1 // pred_fallthru
      _
    // Predicated region
    $region22: #{tpu_custom_call.1} parent=1 // pred_check
      _
    $region23: #{tpu_custom_call.1} parent=1 // pred_check_branch
      %206 = sbr.rel (0) target = $region25
    $region24: #{tpu_custom_call.1} parent=1 // pred_region
      %207 = dma.done [#allocation4], 512
    $region25: #{tpu_custom_call.1} parent=1 // pred_fallthru
      _
    %208 = vsyncpa [#allocation3], 1
    %209 = vsyncpa [#allocation6], 1
    %210 = vsyncpa [#allocation4], 1

</llo_original>
